<compile_context>
chip_gen: v6e
topology: v6e:2x2x1
jax: 0.10.0
libtpu: 0.0.40
codegen_flags: <defaults>
</compile_context>

<pallas_src>
import functools

import jax
import jax.numpy as jnp
from jax import lax
from jax.experimental import pallas as pl
from jax.experimental.pallas import tpu as pltpu

HID = 256      # hidden width of Dirac_Policy (layer=2 -> two 256-wide hidden layers)
A_PAD = 128    # output features padded to one full lane tile (lane-dense stores)


def _round_up(x, m):
    return ((x + m - 1) // m) * m


def _mlp_kernel(x_ref, w_ref, b_ref, o_ref):
    """One batch tile of the 3-layer MLP.

    x_ref : (TILE_B, S)      f32   state tile (pipelined over the batch grid)
    w_ref : (384 + S, 256)   bf16  packed weights, resident across the grid:
              rows [0, 256)       = W2          (256, 256)
              rows [256, 384)     = W3^T padded (A_PAD, 256)
              rows [384, 384 + S) = W1          (S, 256)
    b_ref : (3, 256)         f32   packed biases (b1, b2, b3 zero-padded)
    o_ref : (TILE_B, A_PAD)  f32   tanh output (lane-dense; sliced to A outside)
    """
    s = x_ref.shape[1]
    x = x_ref[...].astype(jnp.bfloat16)              # MXU operands in bf16

    w2 = w_ref[0:HID, :]
    w3t = w_ref[HID:HID + A_PAD, :]
    w1 = w_ref[HID + A_PAD:HID + A_PAD + s, :]

    b1 = b_ref[0:1, :]
    b2 = b_ref[1:2, :]
    b3 = b_ref[2:3, 0:A_PAD]

    h1 = jnp.dot(x, w1, preferred_element_type=jnp.float32) + b1
    h1 = jnp.maximum(h1, 0.0)                         # ReLU (f32 VPU)
    h2 = jnp.dot(h1.astype(jnp.bfloat16), w2,
                 preferred_element_type=jnp.float32) + b2
    h2 = jnp.maximum(h2, 0.0)
    # Last layer stored as W3^T so the packed buffer stays 256 lanes wide;
    # contract over the shared 256-dim (== h2 @ W3).
    y = lax.dot_general(h2.astype(jnp.bfloat16), w3t,
                        dimension_numbers=(((1,), (1,)), ((), ())),
                        preferred_element_type=jnp.float32) + b3
    o_ref[...] = jnp.tanh(y)                          # final_activation='tanh'


@functools.partial(jax.jit, static_argnames=("action_dim", "tile_b"))
def srpo_policy_forward(state, w_pack, b_pack, *, action_dim, tile_b=256):
    """Pallas TPU forward for SRPOPolicy: action = deter_policy(state)."""
    B, S = state.shape
    tile_b = min(tile_b, max(8, _round_up(B, 8)))
    b_pad = _round_up(B, tile_b)
    if b_pad != B:
        state = jnp.pad(state, ((0, b_pad - B), (0, 0)))

    out = pl.pallas_call(
        _mlp_kernel,
        out_shape=jax.ShapeDtypeStruct((b_pad, A_PAD), jnp.float32),
        grid=(b_pad // tile_b,),
        in_specs=[
            # state: pipelined / double-buffered over the batch grid.
            pl.BlockSpec((tile_b, S), lambda i: (i, 0)),
            # packed weights & biases: constant index_map -> fetched once, resident.
            pl.BlockSpec(w_pack.shape, lambda i: (0, 0)),
            pl.BlockSpec(b_pack.shape, lambda i: (0, 0)),
        ],
        out_specs=pl.BlockSpec((tile_b, A_PAD), lambda i: (i, 0)),
        compiler_params=pltpu.CompilerParams(
            # independent batch tiles: shard grid steps across TensorCores (2x on v7x).
            dimension_semantics=("parallel",),
        ),
    )(state, w_pack, b_pack)
    return out[:B, :action_dim]


def init_params(key, state_dim, action_dim, hidden=HID):
    """Synthetic f32 parameters, layout y = x @ W + b (PyTorch Linear weight transposed)."""
    ks = jax.random.split(key, 6)
    w1 = jax.random.normal(ks[0], (state_dim, hidden), jnp.float32) * 0.1
    b1 = jax.random.normal(ks[1], (hidden,), jnp.float32) * 0.01
    w2 = jax.random.normal(ks[2], (hidden, hidden), jnp.float32) * 0.1
    b2 = jax.random.normal(ks[3], (hidden,), jnp.float32) * 0.01
    w3 = jax.random.normal(ks[4], (hidden, action_dim), jnp.float32) * 0.1
    b3 = jax.random.normal(ks[5], (action_dim,), jnp.float32) * 0.01
    return (w1, b1, w2, b2, w3, b3)


def pack_params(params):
    """One-time packing: 2 contiguous buffers (bf16 weights + f32 biases)."""
    w1, b1, w2, b2, w3, b3 = params
    s, hidden = w1.shape
    a = w3.shape[1]
    assert hidden == HID and a <= A_PAD
    w3t = jnp.zeros((A_PAD, HID), jnp.float32).at[:a, :].set(w3.T)
    w_pack = jnp.concatenate([w2, w3t, w1], axis=0).astype(jnp.bfloat16)
    b3p = jnp.zeros((HID,), jnp.float32).at[:a].set(b3)
    b_pack = jnp.stack([b1, b2, b3p], axis=0)          # (3, 256) f32
    return w_pack, b_pack


def reference_forward_f32(state, params):
    w1, b1, w2, b2, w3, b3 = params
    h1 = jnp.maximum(state @ w1 + b1, 0.0)
    h2 = jnp.maximum(h1 @ w2 + b2, 0.0)
    return jnp.tanh(h2 @ w3 + b3)


def reference_forward_bf16(state, params):
    """Same numerics as the kernel: bf16 MXU operands, f32 accumulation/epilogue."""
    w1, b1, w2, b2, w3, b3 = params
    bf = jnp.bfloat16
    h1 = jnp.maximum(jnp.dot(state.astype(bf), w1.astype(bf),
                             preferred_element_type=jnp.float32) + b1, 0.0)
    h2 = jnp.maximum(jnp.dot(h1.astype(bf), w2.astype(bf),
                             preferred_element_type=jnp.float32) + b2, 0.0)
    y = jnp.dot(h2.astype(bf), w3.astype(bf),
                preferred_element_type=jnp.float32) + b3
    return jnp.tanh(y)


if __name__ == "__main__":
    key = jax.random.PRNGKey(0)
    k_state, k_params, k_big = jax.random.split(key, 3)

    batch, state_dim, action_dim = 8, 16, 8
    state = jax.random.normal(k_state, (batch, state_dim), jnp.float32)
    params = init_params(k_params, state_dim, action_dim)
    w_pack, b_pack = pack_params(params)

    action = srpo_policy_forward(state, w_pack, b_pack,
                                 action_dim=action_dim, tile_b=256)
    action = jax.block_until_ready(action)
    assert action.shape == (batch, action_dim)
    assert jnp.allclose(action, reference_forward_bf16(state, params),
                        atol=2e-2, rtol=2e-2)
    assert jnp.allclose(action, reference_forward_f32(state, params),
                        atol=1e-1, rtol=1e-1)

    # Exercise the pipelined multi-tile path (grid > 1, batch not a tile multiple).
    big_batch = 200
    big_state = jax.random.normal(k_big, (big_batch, state_dim), jnp.float32)
    big_action = srpo_policy_forward(big_state, w_pack, b_pack,
                                     action_dim=action_dim, tile_b=64)
    big_action = jax.block_until_ready(big_action)
    assert big_action.shape == (big_batch, action_dim)
    assert jnp.allclose(big_action, reference_forward_bf16(big_state, params),
                        atol=2e-2, rtol=2e-2)

    print("KERNEL_OK")
</pallas_src>

<mosaic_0001>
module attributes {stable_mosaic.version = 11 : i64} {
  func.func @_mlp_kernel(%arg0: i32, %arg1: memref<8x16xf32, #tpu.memory_space<vmem>>, %arg2: memref<400x256xbf16, #tpu.memory_space<vmem>>, %arg3: memref<3x256xf32, #tpu.memory_space<vmem>>, %arg4: memref<8x128xf32, #tpu.memory_space<vmem>>) attributes {dimension_semantics = [#tpu.dimension_semantics<parallel>], iteration_bounds = array<i64: 1>, scalar_prefetch = 0 : i64, scratch_operands = 0 : i64, tpu.core_type = #tpu.core_type<tc>, window_params = [{transform_indices = @transform_0, window_bounds = array<i64: 8, 16>}, {pipeline_mode = #tpu.pipeline_mode<synchronous>, transform_indices = @transform_1, window_bounds = array<i64: 400, 256>}, {pipeline_mode = #tpu.pipeline_mode<synchronous>, transform_indices = @transform_2, window_bounds = array<i64: 3, 256>}, {transform_indices = @transform_3, window_bounds = array<i64: 8, 128>}]} {
    %c0 = arith.constant 0 : index
    %c0_0 = arith.constant 0 : index
    %0 = vector.load %arg1[%c0, %c0_0] : memref<8x16xf32, #tpu.memory_space<vmem>>, vector<8x16xf32>
    %1 = arith.truncf %0 : vector<8x16xf32> to vector<8x16xbf16>
    %c0_1 = arith.constant 0 : index
    %c0_2 = arith.constant 0 : index
    %2 = vector.load %arg2[%c0_1, %c0_2] : memref<400x256xbf16, #tpu.memory_space<vmem>>, vector<256x256xbf16>
    %c256 = arith.constant 256 : index
    %c0_3 = arith.constant 0 : index
    %3 = vector.load %arg2[%c256, %c0_3] : memref<400x256xbf16, #tpu.memory_space<vmem>>, vector<128x256xbf16>
    %c384 = arith.constant 384 : index
    %c0_4 = arith.constant 0 : index
    %4 = vector.load %arg2[%c384, %c0_4] : memref<400x256xbf16, #tpu.memory_space<vmem>>, vector<16x256xbf16>
    %c0_5 = arith.constant 0 : index
    %c0_6 = arith.constant 0 : index
    %5 = vector.load %arg3[%c0_5, %c0_6] : memref<3x256xf32, #tpu.memory_space<vmem>>, vector<1x256xf32>
    %c1 = arith.constant 1 : index
    %c0_7 = arith.constant 0 : index
    %6 = vector.load %arg3[%c1, %c0_7] : memref<3x256xf32, #tpu.memory_space<vmem>>, vector<1x256xf32>
    %c2 = arith.constant 2 : index
    %c0_8 = arith.constant 0 : index
    %7 = vector.load %arg3[%c2, %c0_8] : memref<3x256xf32, #tpu.memory_space<vmem>>, vector<1x128xf32>
    %cst = arith.constant dense<0.000000e+00> : vector<8x256xf32>
    %8 = tpu.matmul %1, %4, %cst {dimension_numbers = #tpu.dot_dimension_numbers<[1], [0], [0], [1], [0, 0, 1, 1], [], []>} : vector<8x16xbf16>, vector<16x256xbf16>, vector<8x256xf32> -> vector<8x256xf32>
    %9 = vector.broadcast %5 : vector<1x256xf32> to vector<8x256xf32>
    %10 = arith.addf %8, %9 : vector<8x256xf32>
    %cst_9 = arith.constant 0.000000e+00 : f32
    %11 = vector.broadcast %cst_9 : f32 to vector<8x256xf32>
    %12 = arith.maximumf %10, %11 : vector<8x256xf32>
    %13 = arith.truncf %12 : vector<8x256xf32> to vector<8x256xbf16>
    %cst_10 = arith.constant dense<0.000000e+00> : vector<8x256xf32>
    %14 = tpu.matmul %13, %2, %cst_10 {dimension_numbers = #tpu.dot_dimension_numbers<[1], [0], [0], [1], [0, 0, 1, 1], [], []>} : vector<8x256xbf16>, vector<256x256xbf16>, vector<8x256xf32> -> vector<8x256xf32>
    %15 = vector.broadcast %6 : vector<1x256xf32> to vector<8x256xf32>
    %16 = arith.addf %14, %15 : vector<8x256xf32>
    %cst_11 = arith.constant 0.000000e+00 : f32
    %17 = vector.broadcast %cst_11 : f32 to vector<8x256xf32>
    %18 = arith.maximumf %16, %17 : vector<8x256xf32>
    %19 = arith.truncf %18 : vector<8x256xf32> to vector<8x256xbf16>
    %cst_12 = arith.constant dense<0.000000e+00> : vector<8x128xf32>
    %20 = tpu.matmul %19, %3, %cst_12 {dimension_numbers = #tpu.dot_dimension_numbers<[1], [1], [0], [0], [0, 0, 1, 0], [], []>} : vector<8x256xbf16>, vector<128x256xbf16>, vector<8x128xf32> -> vector<8x128xf32>
    %21 = vector.broadcast %7 : vector<1x128xf32> to vector<8x128xf32>
    %22 = arith.addf %20, %21 : vector<8x128xf32>
    %23 = math.tanh %22 : vector<8x128xf32>
    %c0_13 = arith.constant 0 : index
    %c0_14 = arith.constant 0 : index
    %24 = vector.load %arg4[%c0_13, %c0_14] : memref<8x128xf32, #tpu.memory_space<vmem>>, vector<8x128xf32>
    tpu.vector_store %arg4[%c0_13, %c0_14], %23 {strides = array<i32>} : memref<8x128xf32, #tpu.memory_space<vmem>>, vector<8x128xf32>,
    return
  }
  func.func @transform_0(%arg0: i32) -> (i32, i32) {
    %c0_i32 = arith.constant 0 : i32
    %c0_i32_0 = arith.constant 0 : i32
    return %arg0, %c0_i32 : i32, i32
  }
  func.func @transform_1(%arg0: i32) -> (i32, i32) {
    %c0_i32 = arith.constant 0 : i32
    %c0_i32_0 = arith.constant 0 : i32
    %c0_i32_1 = arith.constant 0 : i32
    return %c0_i32, %c0_i32_0 : i32, i32
  }
  func.func @transform_2(%arg0: i32) -> (i32, i32) {
    %c0_i32 = arith.constant 0 : i32
    %c0_i32_0 = arith.constant 0 : i32
    %c0_i32_1 = arith.constant 0 : i32
    return %c0_i32, %c0_i32_0 : i32, i32
  }
  func.func @transform_3(%arg0: i32) -> (i32, i32) {
    %c0_i32 = arith.constant 0 : i32
    %c0_i32_0 = arith.constant 0 : i32
    return %arg0, %c0_i32 : i32, i32
  }
}

</mosaic_0001>

<llo_original>
// kernel: srpo_policy_forward.1
$region0: #{srpo_policy_forward.1}
  #allocation0 [shape = 'u32[]', space=smem, size = 0x4, offset = 0x4, fixed_abs, tag = 'smem constant byte address 0x4 - core index']
  #allocation1 [shape = 'u32[144,128]{1,0:T(1,128)}', space=vmem, size = 0x12000, scoped, tag = 'internal scratch']
  %s0 = inlined_call_operand.hbm [shape: f32[8,16], index: 0, kind: input, shape index: {}]
  %s1 = inlined_call_operand.hbm [shape: bf16[400,256], index: 1, kind: input, shape index: {}]
  %s2 = inlined_call_operand.hbm [shape: f32[3,256], index: 2, kind: input, shape index: {}]
  %s3 = inlined_call_operand.hbm [shape: f32[8,128], index: 3, kind: output, shape index: {}]
  %s4 = sld [smem:[#allocation0]]
  $region34: #{srpo_policy_forward.1} parent=0
    _
  %s6 = ssub.s32 1, %s4
  %s7 = scalar_select 0, %s6, %s4
  $region1: #{srpo_policy_forward.1} parent=0
    #allocation2 [shape = 'u8[4096]{0}', space=vmem, size = 0x1000, scoped, tag = 'input window, operand 0, single buffered']
    #allocation3 [shape = 's32[1]{0}', space=sflag, size = 0x4, scoped, tag = 'scoped memory for srpo_policy_forward.1']
    #allocation4 [shape = 's32[1]{0}', space=sflag, size = 0x4, scoped, tag = 'scoped memory for srpo_policy_forward.1']
    #allocation5 [shape = 'u8[204800]{0}', space=vmem, size = 0x32000, scoped, tag = 'input window, operand 1, single buffered']
    #allocation6 [shape = 's32[1]{0}', space=sflag, size = 0x4, scoped, tag = 'scoped memory for srpo_policy_forward.1']
    #allocation7 [shape = 'u8[4096]{0}', space=vmem, size = 0x1000, scoped, tag = 'input window, operand 2, single buffered']
    #allocation8 [shape = 'u8[4096]{0}', space=vmem, size = 0x1000, scoped, tag = 'output window, operand 0, single buffered']
    %8 = vsyncpa [#allocation3], 0
    %9 = vsyncpa [#allocation6], 0
    %10 = vsyncpa [#allocation4], 0
    // Predicated region
    $region2: #{srpo_policy_forward.1} parent=1 // pred_check
      _
    $region3: #{srpo_policy_forward.1} parent=1 // pred_check_branch
      %12 = sbr.rel (0) target = $region5
    $region4: #{srpo_policy_forward.1} parent=1 // pred_region
      %s14 = ssub.s32 128, 128
      %15 = vsyncadd [#allocation3], %s14
      %s17 = sshll.u32 [#allocation2], 4
      %s18 = int_to_ptr.vmem [resolvable:$true] %s17
      %20 = dma.hbm_to_vmem [thread:$0]  %s0, 128, %s18, [#allocation3]
    $region5: #{srpo_policy_forward.1} parent=1 // pred_fallthru
      _
    // Predicated region
    $region6: #{srpo_policy_forward.1} parent=1 // pred_check
      _
    $region7: #{srpo_policy_forward.1} parent=1 // pred_check_branch
      %22 = sbr.rel (0) target = $region9
    $region8: #{srpo_policy_forward.1} parent=1 // pred_region
      %s24 = ssub.s32 6400, 6400
      %25 = vsyncadd [#allocation6], %s24
      %s26 = sshll.u32 [#allocation5], 4
      %s27 = int_to_ptr.vmem [resolvable:$true] %s26
      %32 = dma.hbm_to_vmem [thread:$0]  %s1, 6400, %s27, [#allocation6], 128, 128, 8
    $region9: #{srpo_policy_forward.1} parent=1 // pred_fallthru
      _
    // Predicated region
    $region10: #{srpo_policy_forward.1} parent=1 // pred_check
      _
    $region11: #{srpo_policy_forward.1} parent=1 // pred_check_branch
      %34 = sbr.rel (0) target = $region13
    $region12: #{srpo_policy_forward.1} parent=1 // pred_region
      %s36 = ssub.s32 128, 128
      %37 = vsyncadd [#allocation6], %s36
      %s39 = sshll.u32 [#allocation7], 4
      %s40 = int_to_ptr.vmem [resolvable:$true] %s39
      %42 = dma.hbm_to_vmem [thread:$0]  %s2, 128, %s40, [#allocation6]
    $region13: #{srpo_policy_forward.1} parent=1 // pred_fallthru
      _
    // Predicated region
    $region14: #{srpo_policy_forward.1} parent=1 // pred_check
      _
    $region15: #{srpo_policy_forward.1} parent=1 // pred_check_branch
      %44 = sbr.rel (0) target = $region17
    $region16: #{srpo_policy_forward.1} parent=1 // pred_region
      %45 = dma.done [#allocation3], 128
    $region17: #{srpo_policy_forward.1} parent=1 // pred_fallthru
      _
    // Predicated region
    $region18: #{srpo_policy_forward.1} parent=1 // pred_check
      _
    $region19: #{srpo_policy_forward.1} parent=1 // pred_check_branch
      %47 = sbr.rel (0) target = $region21
    $region20: #{srpo_policy_forward.1} parent=1 // pred_region
      %48 = dma.done [#allocation6], 6400
    $region21: #{srpo_policy_forward.1} parent=1 // pred_fallthru
      _
    // Predicated region
    $region22: #{srpo_policy_forward.1} parent=1 // pred_check
      _
    $region23: #{srpo_policy_forward.1} parent=1 // pred_check_branch
      %50 = sbr.rel (0) target = $region25
    $region24: #{srpo_policy_forward.1} parent=1 // pred_region
      %51 = dma.done [#allocation6], 128
    $region25: #{srpo_policy_forward.1} parent=1 // pred_fallthru
      _
    %v53 = vld [vmem:[#allocation2] sm:$0xff]
    %v54 = vpack.c.bf16 %v53, %v53
    %v55 = vld [vmem:[#allocation5] sm:$0xff]
    %v56 = vld [vmem:[#allocation5 + $0x8] sm:$0xff]
    %v57 = vld [vmem:[#allocation5 + $0x10] sm:$0xff]
    %v58 = vld [vmem:[#allocation5 + $0x18] sm:$0xff]
    %v59 = vld [vmem:[#allocation5 + $0x20] sm:$0xff]
    %v60 = vld [vmem:[#allocation5 + $0x28] sm:$0xff]
    %v61 = vld [vmem:[#allocation5 + $0x30] sm:$0xff]
    %v62 = vld [vmem:[#allocation5 + $0x38] sm:$0xff]
    %v63 = vld [vmem:[#allocation5 + $0x40] sm:$0xff]
    %v64 = vld [vmem:[#allocation5 + $0x48] sm:$0xff]
    %v65 = vld [vmem:[#allocation5 + $0x50] sm:$0xff]
    %v66 = vld [vmem:[#allocation5 + $0x58] sm:$0xff]
    %v67 = vld [vmem:[#allocation5 + $0x60] sm:$0xff]
    %v68 = vld [vmem:[#allocation5 + $0x68] sm:$0xff]
    %v69 = vld [vmem:[#allocation5 + $0x70] sm:$0xff]
    %v70 = vld [vmem:[#allocation5 + $0x78] sm:$0xff]
    %v71 = vld [vmem:[#allocation5 + $0x80] sm:$0xff]
    %v72 = vld [vmem:[#allocation5 + $0x88] sm:$0xff]
    %v73 = vld [vmem:[#allocation5 + $0x90] sm:$0xff]
    %v74 = vld [vmem:[#allocation5 + $0x98] sm:$0xff]
    %v75 = vld [vmem:[#allocation5 + $0xa0] sm:$0xff]
    %v76 = vld [vmem:[#allocation5 + $0xa8] sm:$0xff]
    %v77 = vld [vmem:[#allocation5 + $0xb0] sm:$0xff]
    %v78 = vld [vmem:[#allocation5 + $0xb8] sm:$0xff]
    %v79 = vld [vmem:[#allocation5 + $0xc0] sm:$0xff]
    %v80 = vld [vmem:[#allocation5 + $0xc8] sm:$0xff]
    %v81 = vld [vmem:[#allocation5 + $0xd0] sm:$0xff]
    %v82 = vld [vmem:[#allocation5 + $0xd8] sm:$0xff]
    %v83 = vld [vmem:[#allocation5 + $0xe0] sm:$0xff]
    %v84 = vld [vmem:[#allocation5 + $0xe8] sm:$0xff]
    %v85 = vld [vmem:[#allocation5 + $0xf0] sm:$0xff]
    %v86 = vld [vmem:[#allocation5 + $0xf8] sm:$0xff]
    %v87 = vld [vmem:[#allocation5 + $0x100] sm:$0xff]
    %v88 = vld [vmem:[#allocation5 + $0x108] sm:$0xff]
    %v89 = vld [vmem:[#allocation5 + $0x110] sm:$0xff]
    %v90 = vld [vmem:[#allocation5 + $0x118] sm:$0xff]
    %v91 = vld [vmem:[#allocation5 + $0x120] sm:$0xff]
    %v92 = vld [vmem:[#allocation5 + $0x128] sm:$0xff]
    %v93 = vld [vmem:[#allocation5 + $0x130] sm:$0xff]
    %v94 = vld [vmem:[#allocation5 + $0x138] sm:$0xff]
    %v95 = vld [vmem:[#allocation5 + $0x140] sm:$0xff]
    %v96 = vld [vmem:[#allocation5 + $0x148] sm:$0xff]
    %v97 = vld [vmem:[#allocation5 + $0x150] sm:$0xff]
    %v98 = vld [vmem:[#allocation5 + $0x158] sm:$0xff]
    %v99 = vld [vmem:[#allocation5 + $0x160] sm:$0xff]
    %v100 = vld [vmem:[#allocation5 + $0x168] sm:$0xff]
    %v101 = vld [vmem:[#allocation5 + $0x170] sm:$0xff]
    %v102 = vld [vmem:[#allocation5 + $0x178] sm:$0xff]
    %v103 = vld [vmem:[#allocation5 + $0x180] sm:$0xff]
    %v104 = vld [vmem:[#allocation5 + $0x188] sm:$0xff]
    %v105 = vld [vmem:[#allocation7] ss:$4 sm:$0x3]
    %s106 = scalar_lea.vmem [#allocation7], 1
    %v107 = vld [vmem:[%s106] ss:$4 sm:$0x3]
    %v108 = vld [vmem:[#allocation7 + $0x2] sm:$0x1]
    %v110 = vlaneseq
    %v111 = vshrl.u32 %v110, 7
    %v112 = vsub.s32 0, %v111
    %v113 = vrot.slane %v105, %v112
    %v114 = vlaneseq
    %v115 = vshrl.u32 %v114, 7
    %v116 = vsub.s32 1, %v115
    %v117 = vrot.slane %v105, %v116
    %v122 = vunpack.c.l.b16 %v103
    %v123 = vunpack.c.h.b16 %v103
    %v124 = vunpack.c.l.b16 %v104
    %v125 = vunpack.c.h.b16 %v104
    %v126 = vpack.c.b16 %v124, %v122
    %v127 = vpack.c.b16 %v125, %v123
    %vm130 = vcmask 130048
    %v132 = vsel %vm130, %v54, 0
    %134 = vmatprep.subr.bf16.mxu0 0
    %135 = vmatpush1.bf16.msra.mxu0 0
    %136 = vmatprep.subr.bf16.mxu0 0
    %137 = vmatpush1.bf16.msra.mxu0 0
    %138 = vmatprep.subr.bf16.mxu0 0
    %139 = vmatpush1.bf16.msra.mxu0 0
    %140 = vmatprep.subr.bf16.mxu0 0
    %141 = vmatpush1.bf16.msra.mxu0 0
    %142 = vmatprep.subr.bf16.mxu0 0
    %143 = vmatpush1.bf16.msra.mxu0 0
    %144 = vmatprep.subr.bf16.mxu0 0
    %145 = vmatpush1.bf16.msra.mxu0 0
    %146 = vmatprep.subr.bf16.mxu0 0
    %147 = vmatpush1.bf16.msra.mxu0 0
    %148 = vmatprep.subr.bf16.mxu0 %v127
    %149 = vmatpush1.bf16.msra.mxu0 %v126
    %150 = vmatprep.subr.bf16.mxu0 0
    %151 = vmatpush2.bf16.msra.mxu0 0
    %152 = vmatprep.subr.bf16.mxu0 0
    %153 = vmatpush2.bf16.msra.mxu0 0
    %154 = vmatprep.subr.bf16.mxu0 0
    %155 = vmatpush2.bf16.msra.mxu0 0
    %156 = vmatprep.subr.bf16.mxu0 0
    %157 = vmatpush2.bf16.msra.mxu0 0
    %158 = vmatprep.subr.bf16.mxu0 0
    %159 = vmatpush2.bf16.msra.mxu0 0
    %160 = vmatprep.subr.bf16.mxu0 0
    %161 = vmatpush2.bf16.msra.mxu0 0
    %162 = vmatprep.subr.bf16.mxu0 0
    %163 = vmatpush2.bf16.msra.mxu0 0
    %164 = vmatprep.subr.bf16.mxu0 0
    %165 = vmatpush2.bf16.msra.mxu0 0
    %166 = vmatprep.mubr.bf16.mxu0 0
    %167 = vmatmul.mubr.bf16.gmra.mxu0 %v132
    %v168 = vpop.f32.mrf.mxu0
    %v169 = vadd.f32 %v113, %v168
    %v170 = vpop.f32.mrf.mxu0
    %v171 = vadd.f32 %v117, %v170
    %v172 = vpop.f32.mrf.mxu0
    %v173 = vpop.f32.mrf.mxu0
    %174 = vdwg.mxu0
    %v175 = vmax.f32 %v169, 0.0
    %v176 = vmax.f32 %v171, 0.0
    %v177 = vpack.c.bf16 %v175, %v175
    %v178 = vpack.c.bf16 %v176, %v176
    %v180 = vlaneseq
    %v181 = vshrl.u32 %v180, 7
    %v182 = vsub.s32 0, %v181
    %v183 = vrot.slane %v107, %v182
    %v184 = vlaneseq
    %v185 = vshrl.u32 %v184, 7
    %v186 = vsub.s32 1, %v185
    %v187 = vrot.slane %v107, %v186
    %v222 = vunpack.c.l.b16 %v55
    %v223 = vunpack.c.h.b16 %v55
    %v224 = vunpack.c.l.b16 %v56
    %v225 = vunpack.c.h.b16 %v56
    %v226 = vunpack.c.l.b16 %v57
    %v227 = vunpack.c.h.b16 %v57
    %v228 = vunpack.c.l.b16 %v58
    %v229 = vunpack.c.h.b16 %v58
    %v230 = vunpack.c.l.b16 %v59
    %v231 = vunpack.c.h.b16 %v59
    %v232 = vunpack.c.l.b16 %v60
    %v233 = vunpack.c.h.b16 %v60
    %v234 = vunpack.c.l.b16 %v61
    %v235 = vunpack.c.h.b16 %v61
    %v236 = vunpack.c.l.b16 %v62
    %v237 = vunpack.c.h.b16 %v62
    %v238 = vunpack.c.l.b16 %v63
    %v239 = vunpack.c.h.b16 %v63
    %v240 = vunpack.c.l.b16 %v64
    %v241 = vunpack.c.h.b16 %v64
    %v242 = vunpack.c.l.b16 %v65
    %v243 = vunpack.c.h.b16 %v65
    %v244 = vunpack.c.l.b16 %v66
    %v245 = vunpack.c.h.b16 %v66
    %v246 = vunpack.c.l.b16 %v67
    %v247 = vunpack.c.h.b16 %v67
    %v248 = vunpack.c.l.b16 %v68
    %v249 = vunpack.c.h.b16 %v68
    %v250 = vunpack.c.l.b16 %v69
    %v251 = vunpack.c.h.b16 %v69
    %v252 = vunpack.c.l.b16 %v70
    %v253 = vunpack.c.h.b16 %v70
    %v254 = vunpack.c.l.b16 %v71
    %v255 = vunpack.c.h.b16 %v71
    %v256 = vunpack.c.l.b16 %v72
    %v257 = vunpack.c.h.b16 %v72
    %v258 = vunpack.c.l.b16 %v73
    %v259 = vunpack.c.h.b16 %v73
    %v260 = vunpack.c.l.b16 %v74
    %v261 = vunpack.c.h.b16 %v74
    %v262 = vunpack.c.l.b16 %v75
    %v263 = vunpack.c.h.b16 %v75
    %v264 = vunpack.c.l.b16 %v76
    %v265 = vunpack.c.h.b16 %v76
    %v266 = vunpack.c.l.b16 %v77
    %v267 = vunpack.c.h.b16 %v77
    %v268 = vunpack.c.l.b16 %v78
    %v269 = vunpack.c.h.b16 %v78
    %v270 = vunpack.c.l.b16 %v79
    %v271 = vunpack.c.h.b16 %v79
    %v272 = vunpack.c.l.b16 %v80
    %v273 = vunpack.c.h.b16 %v80
    %v274 = vunpack.c.l.b16 %v81
    %v275 = vunpack.c.h.b16 %v81
    %v276 = vunpack.c.l.b16 %v82
    %v277 = vunpack.c.h.b16 %v82
    %v278 = vunpack.c.l.b16 %v83
    %v279 = vunpack.c.h.b16 %v83
    %v280 = vunpack.c.l.b16 %v84
    %v281 = vunpack.c.h.b16 %v84
    %v282 = vunpack.c.l.b16 %v85
    %v283 = vunpack.c.h.b16 %v85
    %v284 = vunpack.c.l.b16 %v86
    %v285 = vunpack.c.h.b16 %v86
    %v286 = vpack.c.b16 %v224, %v222
    %v287 = vpack.c.b16 %v225, %v223
    %v288 = vpack.c.b16 %v228, %v226
    %v289 = vpack.c.b16 %v229, %v227
    %v290 = vpack.c.b16 %v232, %v230
    %v291 = vpack.c.b16 %v233, %v231
    %v292 = vpack.c.b16 %v236, %v234
    %v293 = vpack.c.b16 %v237, %v235
    %v294 = vpack.c.b16 %v240, %v238
    %v295 = vpack.c.b16 %v241, %v239
    %v296 = vpack.c.b16 %v244, %v242
    %v297 = vpack.c.b16 %v245, %v243
    %v298 = vpack.c.b16 %v248, %v246
    %v299 = vpack.c.b16 %v249, %v247
    %v300 = vpack.c.b16 %v252, %v250
    %v301 = vpack.c.b16 %v253, %v251
    %v302 = vpack.c.b16 %v256, %v254
    %v303 = vpack.c.b16 %v257, %v255
    %v304 = vpack.c.b16 %v260, %v258
    %v305 = vpack.c.b16 %v261, %v259
    %v306 = vpack.c.b16 %v264, %v262
    %v307 = vpack.c.b16 %v265, %v263
    %v308 = vpack.c.b16 %v268, %v266
    %v309 = vpack.c.b16 %v269, %v267
    %v310 = vpack.c.b16 %v272, %v270
    %v311 = vpack.c.b16 %v273, %v271
    %v312 = vpack.c.b16 %v276, %v274
    %v313 = vpack.c.b16 %v277, %v275
    %v314 = vpack.c.b16 %v280, %v278
    %v315 = vpack.c.b16 %v281, %v279
    %v316 = vpack.c.b16 %v284, %v282
    %v317 = vpack.c.b16 %v285, %v283
    %350 = vmatprep.subr.bf16.mxu0 %v301
    %351 = vmatpush1.bf16.msra.mxu0 %v300
    %352 = vmatprep.subr.bf16.mxu0 %v299
    %353 = vmatpush1.bf16.msra.mxu0 %v298
    %354 = vmatprep.subr.bf16.mxu0 %v297
    %355 = vmatpush1.bf16.msra.mxu0 %v296
    %356 = vmatprep.subr.bf16.mxu0 %v295
    %357 = vmatpush1.bf16.msra.mxu0 %v294
    %358 = vmatprep.subr.bf16.mxu0 %v293
    %359 = vmatpush1.bf16.msra.mxu0 %v292
    %360 = vmatprep.subr.bf16.mxu0 %v291
    %361 = vmatpush1.bf16.msra.mxu0 %v290
    %362 = vmatprep.subr.bf16.mxu0 %v289
    %363 = vmatpush1.bf16.msra.mxu0 %v288
    %364 = vmatprep.subr.bf16.mxu0 %v287
    %365 = vmatpush1.bf16.msra.mxu0 %v286
    %366 = vmatprep.subr.bf16.mxu0 %v317
    %367 = vmatpush2.bf16.msra.mxu0 %v316
    %368 = vmatprep.subr.bf16.mxu0 %v315
    %369 = vmatpush2.bf16.msra.mxu0 %v314
    %370 = vmatprep.subr.bf16.mxu0 %v313
    %371 = vmatpush2.bf16.msra.mxu0 %v312
    %372 = vmatprep.subr.bf16.mxu0 %v311
    %373 = vmatpush2.bf16.msra.mxu0 %v310
    %374 = vmatprep.subr.bf16.mxu0 %v309
    %375 = vmatpush2.bf16.msra.mxu0 %v308
    %376 = vmatprep.subr.bf16.mxu0 %v307
    %377 = vmatpush2.bf16.msra.mxu0 %v306
    %378 = vmatprep.subr.bf16.mxu0 %v305
    %379 = vmatpush2.bf16.msra.mxu0 %v304
    %380 = vmatprep.subr.bf16.mxu0 %v303
    %381 = vmatpush2.bf16.msra.mxu0 %v302
    %382 = vmatprep.mubr.bf16.mxu0 %v178
    %383 = vmatmul.mubr.bf16.gmra.mxu0 %v177
    %v384 = vpop.f32.mrf.mxu0
    %v385 = vadd.f32 %v183, %v384
    %v386 = vpop.f32.mrf.mxu0
    %v387 = vadd.f32 %v187, %v386
    %v388 = vpop.f32.mrf.mxu0
    %v389 = vpop.f32.mrf.mxu0
    %390 = vdwg.mxu0
    %v391 = vmax.f32 %v385, 0.0
    %v392 = vmax.f32 %v387, 0.0
    %v393 = vpack.c.bf16 %v391, %v391
    %v394 = vpack.c.bf16 %v392, %v392
    %v395 = vlaneseq
    %v396 = vshrl.u32 %v395, 7
    %v397 = vsub.s32 0, %v396
    %v398 = vrot.slane %v108, %v397
    %v415 = vunpack.c.l.b16 %v87
    %v416 = vunpack.c.h.b16 %v87
    %v417 = vunpack.c.l.b16 %v88
    %v418 = vunpack.c.h.b16 %v88
    %v419 = vunpack.c.l.b16 %v89
    %v420 = vunpack.c.h.b16 %v89
    %v421 = vunpack.c.l.b16 %v90
    %v422 = vunpack.c.h.b16 %v90
    %v423 = vunpack.c.l.b16 %v91
    %v424 = vunpack.c.h.b16 %v91
    %v425 = vunpack.c.l.b16 %v92
    %v426 = vunpack.c.h.b16 %v92
    %v427 = vunpack.c.l.b16 %v93
    %v428 = vunpack.c.h.b16 %v93
    %v429 = vunpack.c.l.b16 %v94
    %v430 = vunpack.c.h.b16 %v94
    %v431 = vunpack.c.l.b16 %v95
    %v432 = vunpack.c.h.b16 %v95
    %v433 = vunpack.c.l.b16 %v96
    %v434 = vunpack.c.h.b16 %v96
    %v435 = vunpack.c.l.b16 %v97
    %v436 = vunpack.c.h.b16 %v97
    %v437 = vunpack.c.l.b16 %v98
    %v438 = vunpack.c.h.b16 %v98
    %v439 = vunpack.c.l.b16 %v99
    %v440 = vunpack.c.h.b16 %v99
    %v441 = vunpack.c.l.b16 %v100
    %v442 = vunpack.c.h.b16 %v100
    %v443 = vunpack.c.l.b16 %v101
    %v444 = vunpack.c.h.b16 %v101
    %v445 = vunpack.c.l.b16 %v102
    %v446 = vunpack.c.h.b16 %v102
    %v447 = vpack.c.b16 %v417, %v415
    %v448 = vpack.c.b16 %v418, %v416
    %v449 = vpack.c.b16 %v421, %v419
    %v450 = vpack.c.b16 %v422, %v420
    %v451 = vpack.c.b16 %v425, %v423
    %v452 = vpack.c.b16 %v426, %v424
    %v453 = vpack.c.b16 %v429, %v427
    %v454 = vpack.c.b16 %v430, %v428
    %v455 = vpack.c.b16 %v433, %v431
    %v456 = vpack.c.b16 %v434, %v432
    %v457 = vpack.c.b16 %v437, %v435
    %v458 = vpack.c.b16 %v438, %v436
    %v459 = vpack.c.b16 %v441, %v439
    %v460 = vpack.c.b16 %v442, %v440
    %v461 = vpack.c.b16 %v445, %v443
    %v462 = vpack.c.b16 %v446, %v444
    %479 = vmatprep.subr.bf16.mxu0 %v462
    %480 = vmatpush1.bf16.xpose.msra.mxu0 %v461
    %481 = vmatprep.subr.bf16.mxu0 %v460
    %482 = vmatpush1.bf16.xpose.msra.mxu0 %v459
    %483 = vmatprep.subr.bf16.mxu0 %v458
    %484 = vmatpush1.bf16.xpose.msra.mxu0 %v457
    %485 = vmatprep.subr.bf16.mxu0 %v456
    %486 = vmatpush1.bf16.xpose.msra.mxu0 %v455
    %487 = vmatprep.subr.bf16.mxu0 %v454
    %488 = vmatpush1.bf16.xpose.msra.mxu0 %v453
    %489 = vmatprep.subr.bf16.mxu0 %v452
    %490 = vmatpush1.bf16.xpose.msra.mxu0 %v451
    %491 = vmatprep.subr.bf16.mxu0 %v450
    %492 = vmatpush1.bf16.xpose.msra.mxu0 %v449
    %493 = vmatprep.subr.bf16.mxu0 %v448
    %494 = vmatpush1.bf16.xpose.msra.mxu0 %v447
    %495 = vmatprep.subr.bf16.mxu0 0
    %496 = vmatpush2.bf16.xpose.msra.mxu0 0
    %497 = vmatprep.subr.bf16.mxu0 0
    %498 = vmatpush2.bf16.xpose.msra.mxu0 0
    %499 = vmatprep.subr.bf16.mxu0 0
    %500 = vmatpush2.bf16.xpose.msra.mxu0 0
    %501 = vmatprep.subr.bf16.mxu0 0
    %502 = vmatpush2.bf16.xpose.msra.mxu0 0
    %503 = vmatprep.subr.bf16.mxu0 0
    %504 = vmatpush2.bf16.xpose.msra.mxu0 0
    %505 = vmatprep.subr.bf16.mxu0 0
    %506 = vmatpush2.bf16.xpose.msra.mxu0 0
    %507 = vmatprep.subr.bf16.mxu0 0
    %508 = vmatpush2.bf16.xpose.msra.mxu0 0
    %509 = vmatprep.subr.bf16.mxu0 0
    %510 = vmatpush2.bf16.xpose.msra.mxu0 0
    %511 = vmatprep.mubr.bf16.mxu0 %v394
    %512 = vmatmul.mubr.bf16.gmra.mxu0 %v393
    %v513 = vpop.f32.mrf.mxu0
    %v514 = vadd.f32 %v398, %v513
    %v515 = vpop.f32.mrf.mxu0
    %v516 = vpop.f32.mrf.mxu0
    %v517 = vpop.f32.mrf.mxu0
    %518 = vdwg.mxu0
    %v519 = vtanh.pop %v514
    %520 = vst [vmem:[#allocation8] sm:$0xff] %v519
    // Predicated region
    $region26: #{srpo_policy_forward.1} parent=1 // pred_check
      _
    $region27: #{srpo_policy_forward.1} parent=1 // pred_check_branch
      %522 = sbr.rel (0) target = $region29
    $region28: #{srpo_policy_forward.1} parent=1 // pred_region
      %s524 = ssub.s32 128, 128
      %525 = vsyncadd [#allocation4], %s524
      %s527 = sshll.u32 [#allocation8], 4
      %s528 = int_to_ptr.vmem [resolvable:$true] %s527
      %530 = dma.vmem_to_hbm [thread:$0]  %s528, 128, %s3, [#allocation4]
    $region29: #{srpo_policy_forward.1} parent=1 // pred_fallthru
      _
    // Predicated region
    $region30: #{srpo_policy_forward.1} parent=1 // pred_check
      _
    $region31: #{srpo_policy_forward.1} parent=1 // pred_check_branch
      %532 = sbr.rel (0) target = $region33
    $region32: #{srpo_policy_forward.1} parent=1 // pred_region
      %533 = dma.done [#allocation4], 128
    $region33: #{srpo_policy_forward.1} parent=1 // pred_fallthru
      _
    %534 = vsyncpa [#allocation3], 1
    %535 = vsyncpa [#allocation6], 1
    %536 = vsyncpa [#allocation4], 1

</llo_original>
